<compile_context>
chip_gen: v7x
topology: tpu7x:2x2x1
jax: 0.10.0
libtpu: 0.0.40
codegen_flags: <defaults>
</compile_context>

<pallas_src>
import functools

import jax
import jax.numpy as jnp
from jax.experimental import pallas as pl
from jax.experimental.pallas import tpu as pltpu


def _round_up(v, m):
    return -(-v // m) * m


def _global_max_kernel(x_ref, o_ref, acc_ref, *, min_val):
    # x_ref:   (NB, CB, HB, W) input tile (one spatial row-chunk)
    # o_ref:   (NB, 1, CB)     output tile (written once, on the last chunk)
    # acc_ref: (NB, CB, W)     running max, same dtype as the input
    k = pl.program_id(2)

    @pl.when(k == 0)
    def _init():
        acc_ref[...] = jnp.full(acc_ref.shape, min_val, acc_ref.dtype)

    # Steady state: one sublane reduce over the H chunk + elementwise VPU max
    # into the lane-shaped accumulator.  Cross-lane reduce happens only once,
    # in the finalize below.
    chunk_max = jnp.max(x_ref[...], axis=2)                  # (NB, CB, W)
    acc_ref[...] = jnp.maximum(acc_ref[...], chunk_max)

    @pl.when(k == pl.num_programs(2) - 1)
    def _finalize():
        o_ref[:, 0, :] = jnp.max(acc_ref[...], axis=-1).astype(o_ref.dtype)


def _choose_tiling(N, C, H, W, itemsize, num_cores, tile_budget_bytes=8 << 20):
    """Pick (NB, CB, HB) so input blocks are ~8 MiB (padded) and tile exactly."""

    def block_bytes(nb, cb, hb):
        # Padded VMEM footprint of one input block: (sublane, lane) = (hb, W).
        return nb * cb * _round_up(hb, 8) * _round_up(W, 128) * itemsize

    # Spatial (reduction) chunk: multiples of 8 sublanes, or the full H.
    h_candidates = sorted({d for d in range(8, H + 1, 8) if H % d == 0} | {H})

    # Channel blocking: only split when the output stays lane-dense
    # (CB a multiple of 128); otherwise keep the full C per step.
    if C % 128 == 0:
        c_candidates = sorted(d for d in range(128, C + 1, 128) if C % d == 0)
    else:
        c_candidates = [C]
    # TODO(synk): very large C*W with C not a multiple of 128 cannot be split
    # further here and may exceed the tile budget; such shapes simply get a
    # larger (but still bounded-by-vmem_limit) block.

    cb = c_candidates[0]
    hb = h_candidates[0]
    for d in c_candidates:                 # prefer full channels per step
        if block_bytes(1, d, hb) <= tile_budget_bytes:
            cb = d
    for d in h_candidates:                 # then grow the spatial chunk
        if block_bytes(1, cb, d) <= tile_budget_bytes:
            hb = d

    fitting = [d for d in range(1, N + 1)
               if N % d == 0 and block_bytes(d, cb, hb) <= tile_budget_bytes]
    if not fitting:
        fitting = [1]
    nb = max(fitting)                      # 1 TC: fewest, largest grid steps
    if num_cores >= 2:
        # Megacore: prefer an even (>=2) parallel extent so neither core idles.
        even = [d for d in fitting if (N // d) >= 2 and (N // d) % 2 == 0]
        if even:
            nb = max(even)
    return nb, cb, hb


def fast_global_max_pooling(x):
    """Pallas equivalent of torch.amax(x, dim=(2, 3)) for NCHW x."""
    N, C, H, W = x.shape
    dtype = x.dtype
    itemsize = jnp.dtype(dtype).itemsize

    try:
        num_cores = int(getattr(jax.devices()[0], "num_cores", 1))
    except Exception:  # pragma: no cover - defensive, attribute shape varies
        num_cores = 1

    NB, CB, HB = _choose_tiling(N, C, H, W, itemsize, num_cores)
    grid = (N // NB, C // CB, H // HB)     # reduction (spatial) axis last

    # Identity of max in the input dtype (no f32 upcast: max is exact).
    if jnp.issubdtype(dtype, jnp.floating):
        min_val = float("-inf")
    elif jnp.issubdtype(dtype, jnp.bool_):
        min_val = False
    else:
        min_val = int(jnp.iinfo(dtype).min)

    # VMEM budget from actual need: 2x double-buffered input block + scratch
    # accumulator + 2x output block, with ~2x headroom, capped well under the
    # 64 MiB physical VMEM of a v7x TensorCore.
    in_block = NB * CB * _round_up(HB, 8) * _round_up(W, 128) * itemsize
    acc_block = NB * _round_up(CB, 8) * _round_up(W, 128) * itemsize
    out_block = NB * 8 * _round_up(CB, 128) * itemsize
    vmem_need = 2 * in_block + acc_block + 2 * out_block
    vmem_limit = max(4 << 20, min(2 * vmem_need + (1 << 20), 48 << 20))

    cost = pl.CostEstimate(
        flops=N * C * H * W,               # one compare/max per element
        transcendentals=0,
        bytes_accessed=N * C * H * W * itemsize + N * C * itemsize,
    )

    kernel = functools.partial(_global_max_kernel, min_val=min_val)

    out = pl.pallas_call(
        kernel,
        out_shape=jax.ShapeDtypeStruct((N, 1, C), dtype),
        grid=grid,
        in_specs=[pl.BlockSpec((NB, CB, HB, W), lambda i, j, k: (i, j, k, 0))],
        out_specs=pl.BlockSpec((NB, 1, CB), lambda i, j, k: (i, 0, j)),
        scratch_shapes=[pltpu.VMEM((NB, CB, W), dtype)],
        compiler_params=pltpu.CompilerParams(
            dimension_semantics=("parallel", "parallel", "arbitrary"),
            vmem_limit_bytes=int(vmem_limit),
        ),
        cost_estimate=cost,
    )(x)

    # Output is H*W-times smaller than the input; this squeeze is negligible.
    return out.reshape(N, C)


if __name__ == "__main__":
    key = jax.random.PRNGKey(0)
    # Small shape consistent with a CIFAR-style NCHW activation.
    x = jax.random.normal(key, (2, 4, 16, 16), dtype=jnp.float32)

    y = fast_global_max_pooling(x)
    y = jax.block_until_ready(y)

    # Reference: torch.amax(x, dim=(2, 3)) semantics.
    y_ref = jnp.max(x, axis=(2, 3))
    assert y.shape == (2, 4), y.shape
    assert y.dtype == x.dtype
    assert jnp.allclose(y, y_ref), "mismatch vs reference global max pool"

    print("KERNEL_OK")
</pallas_src>

<mosaic_0001>
module attributes {stable_mosaic.version = 11 : i64} {
  func.func @_global_max_kernel(%arg0: i32, %arg1: i32, %arg2: i32, %arg3: memref<2x4x16x16xf32, #tpu.memory_space<vmem>>, %arg4: memref<2x1x4xf32, #tpu.memory_space<vmem>>, %arg5: memref<2x4x16xf32, #tpu.memory_space<vmem>>) attributes {dimension_semantics = [#tpu.dimension_semantics<parallel>, #tpu.dimension_semantics<parallel>, #tpu.dimension_semantics<arbitrary>], iteration_bounds = array<i64: 1, 1, 1>, scalar_prefetch = 0 : i64, scratch_operands = 1 : i64, tpu.core_type = #tpu.core_type<tc>, window_params = [{transform_indices = @transform_0, window_bounds = array<i64: 2, 4, 16, 16>}, {transform_indices = @transform_1, window_bounds = array<i64: 2, 1, 4>}]} {
    %c0_i32 = arith.constant 0 : i32
    %0 = arith.cmpi eq, %arg2, %c0_i32 : i32
    %1 = arith.extui %0 : i1 to i32
    %c0_i32_0 = arith.constant 0 : i32
    %2 = arith.cmpi ne, %1, %c0_i32_0 : i32
    scf.if %2 {
      %cst_12 = arith.constant 0xFF800000 : f32
      %11 = vector.broadcast %cst_12 : f32 to vector<2x4x16xf32>
      %c0_13 = arith.constant 0 : index
      %c0_14 = arith.constant 0 : index
      %c0_15 = arith.constant 0 : index
      %12 = vector.load %arg5[%c0_13, %c0_14, %c0_15] : memref<2x4x16xf32, #tpu.memory_space<vmem>>, vector<2x4x16xf32>
      tpu.vector_store %arg5[%c0_13, %c0_14, %c0_15], %11 {strides = array<i32>} : memref<2x4x16xf32, #tpu.memory_space<vmem>>, vector<2x4x16xf32>,
    } else {
    }
    %c0 = arith.constant 0 : index
    %c0_1 = arith.constant 0 : index
    %c0_2 = arith.constant 0 : index
    %c0_3 = arith.constant 0 : index
    %3 = vector.load %arg3[%c0, %c0_1, %c0_2, %c0_3] : memref<2x4x16x16xf32, #tpu.memory_space<vmem>>, vector<2x4x16x16xf32>
    %cst = arith.constant dense<0xFF800000> : vector<2x4x16xf32>
    %4 = vector.multi_reduction <maximumf>, %3, %cst [2] : vector<2x4x16x16xf32> to vector<2x4x16xf32>
    %c0_4 = arith.constant 0 : index
    %c0_5 = arith.constant 0 : index
    %c0_6 = arith.constant 0 : index
    %5 = vector.load %arg5[%c0_4, %c0_5, %c0_6] : memref<2x4x16xf32, #tpu.memory_space<vmem>>, vector<2x4x16xf32>
    %6 = arith.maximumf %5, %4 : vector<2x4x16xf32>
    %c0_7 = arith.constant 0 : index
    %c0_8 = arith.constant 0 : index
    %c0_9 = arith.constant 0 : index
    %7 = vector.load %arg5[%c0_7, %c0_8, %c0_9] : memref<2x4x16xf32, #tpu.memory_space<vmem>>, vector<2x4x16xf32>
    tpu.vector_store %arg5[%c0_7, %c0_8, %c0_9], %6 {strides = array<i32>} : memref<2x4x16xf32, #tpu.memory_space<vmem>>, vector<2x4x16xf32>,
    %c0_i32_10 = arith.constant 0 : i32
    %8 = arith.cmpi eq, %arg2, %c0_i32_10 : i32
    %9 = arith.extui %8 : i1 to i32
    %c0_i32_11 = arith.constant 0 : i32
    %10 = arith.cmpi ne, %9, %c0_i32_11 : i32
    scf.if %10 {
      %c0_12 = arith.constant 0 : index
      %c0_13 = arith.constant 0 : index
      %c0_14 = arith.constant 0 : index
      %11 = vector.load %arg5[%c0_12, %c0_13, %c0_14] : memref<2x4x16xf32, #tpu.memory_space<vmem>>, vector<2x4x16xf32>
      %cst_15 = arith.constant dense<0xFF800000> : vector<2x4xf32>
      %12 = vector.multi_reduction <maximumf>, %11, %cst_15 [2] : vector<2x4x16xf32> to vector<2x4xf32>
      %c0_16 = arith.constant 0 : index
      %c0_17 = arith.constant 0 : index
      %c0_18 = arith.constant 0 : index
      %13 = vector.load %arg4[%c0_16, %c0_17, %c0_18] : memref<2x1x4xf32, #tpu.memory_space<vmem>>, vector<2x1x4xf32>
      %14 = vector.shape_cast %13 : vector<2x1x4xf32> to vector<2x4xf32>
      %15 = vector.shape_cast %12 : vector<2x4xf32> to vector<2x1x4xf32>
      tpu.vector_store %arg4[%c0_16, %c0_17, %c0_18], %15 {strides = array<i32>} : memref<2x1x4xf32, #tpu.memory_space<vmem>>, vector<2x1x4xf32>,
    } else {
    }
    return
  }
  func.func @transform_0(%arg0: i32, %arg1: i32, %arg2: i32) -> (i32, i32, i32, i32) {
    %c0_i32 = arith.constant 0 : i32
    %c0_i32_0 = arith.constant 0 : i32
    return %arg0, %arg1, %arg2, %c0_i32 : i32, i32, i32, i32
  }
  func.func @transform_1(%arg0: i32, %arg1: i32, %arg2: i32) -> (i32, i32, i32) {
    %c0_i32 = arith.constant 0 : i32
    %c0_i32_0 = arith.constant 0 : i32
    return %arg0, %c0_i32, %arg1 : i32, i32, i32
  }
}

</mosaic_0001>

<llo_original>
// kernel: tpu_custom_call.1
$region0: #{tpu_custom_call.1}
  #allocation0 [shape = 'u32[]', space=smem, size = 0x4, offset = 0x4, fixed_abs, tag = 'smem constant byte address 0x4 - core index']
  #allocation1 [shape = 'u32[144,128]{1,0:T(1,128)}', space=vmem, size = 0x12000, scoped, tag = 'internal scratch']
  #allocation2 [shape = 'f32[2,4,16]{2,1,0:T(4,128)}', space=vmem, size = 0x1000, scoped, tag = 'scratch operand']
  %s0 = inlined_call_operand.hbm [shape: f32[2,4,16,16], index: 0, kind: input, shape index: {}]
  %s1 = inlined_call_operand.hbm [shape: f32[2,1,4], index: 1, kind: output, shape index: {}]
  %s2 = sld [smem:[#allocation0]]
  $region26: #{tpu_custom_call.1} parent=0
    _
  %s4 = ssub.s32 1, %s2
  %s5 = scalar_select 0, %s4, %s2
  $region1: #{tpu_custom_call.1} parent=0
    #allocation3 [shape = 'u8[65536]{0}', space=vmem, size = 0x10000, scoped, tag = 'input window, operand 0, single buffered']
    #allocation4 [shape = 's32[1]{0}', space=sflag, size = 0x4, scoped, tag = 'scoped memory for tpu_custom_call.1']
    #allocation5 [shape = 's32[1]{0}', space=sflag, size = 0x4, scoped, tag = 'scoped memory for tpu_custom_call.1']
    #allocation6 [shape = 'u8[1024]{0}', space=vmem, size = 0x400, scoped, tag = 'output window, operand 0, single buffered']
    %6 = vsyncpa [#allocation4], 0
    %7 = vsyncpa [#allocation5], 0
    // Predicated region
    $region2: #{tpu_custom_call.1} parent=1 // pred_check
      _
    $region3: #{tpu_custom_call.1} parent=1 // pred_check_branch
      %9 = sbr.rel (0) target = $region5
    $region4: #{tpu_custom_call.1} parent=1 // pred_region
      %s11 = ssub.s32 2048, 2048
      %12 = vsyncadd [#allocation4], %s11
      %s13 = sshll.u32 [#allocation3], 4
      %s14 = int_to_ptr.vmem [resolvable:$true] %s13
      %19 = dma.hbm_to_vmem [thread:$0]  %s0, 2048, %s14, [#allocation4], 128, 128, 8
    $region5: #{tpu_custom_call.1} parent=1 // pred_fallthru
      _
    // Predicated region
    $region6: #{tpu_custom_call.1} parent=1 // pred_check
      _
    $region7: #{tpu_custom_call.1} parent=1 // pred_check_branch
      %21 = sbr.rel (0) target = $region9
    $region8: #{tpu_custom_call.1} parent=1 // pred_region
      %22 = dma.done [#allocation4], 2048
    $region9: #{tpu_custom_call.1} parent=1 // pred_fallthru
      _
    %p23 = scmp.eq.s32.totalorder 0, 0
    // Predicated region
    $region10: #{tpu_custom_call.1} parent=1 // pred_check
      %p24 = pneg %p23
    $region11: #{tpu_custom_call.1} parent=1 // pred_check_branch
      %26 = sbr.rel (%p24) target = $region13
    $region12: #{tpu_custom_call.1} parent=1 // pred_region
      %vm27 = vcmask 125952
      %28 = vst.msk [vmem:[#allocation2] sm:$0xf] %vm27, -inf
      %29 = vst.msk [vmem:[#allocation2 + $0x4] sm:$0xf] %vm27, -inf
    $region13: #{tpu_custom_call.1} parent=1 // pred_fallthru
      _
    %v30 = vld [vmem:[#allocation3] sm:$0xff]
    %v31 = vld [vmem:[#allocation3 + $0x8] sm:$0xff]
    %v32 = vld [vmem:[#allocation3 + $0x10] sm:$0xff]
    %v33 = vld [vmem:[#allocation3 + $0x18] sm:$0xff]
    %v34 = vld [vmem:[#allocation3 + $0x20] sm:$0xff]
    %v35 = vld [vmem:[#allocation3 + $0x28] sm:$0xff]
    %v36 = vld [vmem:[#allocation3 + $0x30] sm:$0xff]
    %v37 = vld [vmem:[#allocation3 + $0x38] sm:$0xff]
    %v38 = vld [vmem:[#allocation3 + $0x40] sm:$0xff]
    %v39 = vld [vmem:[#allocation3 + $0x48] sm:$0xff]
    %v40 = vld [vmem:[#allocation3 + $0x50] sm:$0xff]
    %v41 = vld [vmem:[#allocation3 + $0x58] sm:$0xff]
    %v42 = vld [vmem:[#allocation3 + $0x60] sm:$0xff]
    %v43 = vld [vmem:[#allocation3 + $0x68] sm:$0xff]
    %v44 = vld [vmem:[#allocation3 + $0x70] sm:$0xff]
    %v45 = vld [vmem:[#allocation3 + $0x78] sm:$0xff]
    %vm46 = vcmask 130048
    %v47 = vsel %vm46, %v30, -inf
    %v48 = vsel %vm46, %v31, -inf
    %v49 = vmax.f32 %v47, %v48
    %v50 = vrot.slane %v49, 4
    %v51 = vmax.f32 %v49, %v50
    %v52 = vrot.slane %v51, 2
    %v53 = vmax.f32 %v51, %v52
    %v54 = vrot.slane %v53, 1
    %v55 = vmax.f32 %v53, %v54
    %v56 = vsel %vm46, %v32, -inf
    %v57 = vsel %vm46, %v33, -inf
    %v58 = vmax.f32 %v56, %v57
    %v59 = vrot.slane %v58, 4
    %v60 = vmax.f32 %v58, %v59
    %v61 = vrot.slane %v60, 2
    %v62 = vmax.f32 %v60, %v61
    %v63 = vrot.slane %v62, 1
    %v64 = vmax.f32 %v62, %v63
    %v65 = vsel %vm46, %v34, -inf
    %v66 = vsel %vm46, %v35, -inf
    %v67 = vmax.f32 %v65, %v66
    %v68 = vrot.slane %v67, 4
    %v69 = vmax.f32 %v67, %v68
    %v70 = vrot.slane %v69, 2
    %v71 = vmax.f32 %v69, %v70
    %v72 = vrot.slane %v71, 1
    %v73 = vmax.f32 %v71, %v72
    %v74 = vsel %vm46, %v36, -inf
    %v75 = vsel %vm46, %v37, -inf
    %v76 = vmax.f32 %v74, %v75
    %v77 = vrot.slane %v76, 4
    %v78 = vmax.f32 %v76, %v77
    %v79 = vrot.slane %v78, 2
    %v80 = vmax.f32 %v78, %v79
    %v81 = vrot.slane %v80, 1
    %v82 = vmax.f32 %v80, %v81
    %v83 = vsel %vm46, %v38, -inf
    %v84 = vsel %vm46, %v39, -inf
    %v85 = vmax.f32 %v83, %v84
    %v86 = vrot.slane %v85, 4
    %v87 = vmax.f32 %v85, %v86
    %v88 = vrot.slane %v87, 2
    %v89 = vmax.f32 %v87, %v88
    %v90 = vrot.slane %v89, 1
    %v91 = vmax.f32 %v89, %v90
    %v92 = vsel %vm46, %v40, -inf
    %v93 = vsel %vm46, %v41, -inf
    %v94 = vmax.f32 %v92, %v93
    %v95 = vrot.slane %v94, 4
    %v96 = vmax.f32 %v94, %v95
    %v97 = vrot.slane %v96, 2
    %v98 = vmax.f32 %v96, %v97
    %v99 = vrot.slane %v98, 1
    %v100 = vmax.f32 %v98, %v99
    %v101 = vsel %vm46, %v42, -inf
    %v102 = vsel %vm46, %v43, -inf
    %v103 = vmax.f32 %v101, %v102
    %v104 = vrot.slane %v103, 4
    %v105 = vmax.f32 %v103, %v104
    %v106 = vrot.slane %v105, 2
    %v107 = vmax.f32 %v105, %v106
    %v108 = vrot.slane %v107, 1
    %v109 = vmax.f32 %v107, %v108
    %v110 = vsel %vm46, %v44, -inf
    %v111 = vsel %vm46, %v45, -inf
    %v112 = vmax.f32 %v110, %v111
    %v113 = vrot.slane %v112, 4
    %v114 = vmax.f32 %v112, %v113
    %v115 = vrot.slane %v114, 2
    %v116 = vmax.f32 %v114, %v115
    %v117 = vrot.slane %v116, 1
    %v118 = vmax.f32 %v116, %v117
    %v119 = vld [vmem:[#allocation2] sm:$0xf]
    %v120 = vld [vmem:[#allocation2 + $0x4] sm:$0xf]
    %vm129 = vcmask 1041409
    %v130 = vsel %vm129, %v64, %v55
    %vm131 = vcmask 1042434
    %v132 = vsel %vm131, %v73, %v130
    %vm133 = vcmask 1043459
    %v134 = vsel %vm133, %v82, %v132
    %v135 = vsel %vm129, %v100, %v91
    %v136 = vsel %vm131, %v109, %v135
    %v137 = vsel %vm133, %v118, %v136
    %v140 = vmax.f32 %v119, %v134
    %v141 = vmax.f32 %v120, %v137
    %vm142 = vcmask 125952
    %143 = vst.msk [vmem:[#allocation2] sm:$0xf] %vm142, %v140
    %144 = vst.msk [vmem:[#allocation2 + $0x4] sm:$0xf] %vm142, %v141
    // Predicated region
    $region14: #{tpu_custom_call.1} parent=1 // pred_check
      %p145 = pneg %p23
    $region15: #{tpu_custom_call.1} parent=1 // pred_check_branch
      %147 = sbr.rel (%p145) target = $region17
    $region16: #{tpu_custom_call.1} parent=1 // pred_region
      %v148 = vld [vmem:[#allocation2] sm:$0xf]
      %v149 = vld [vmem:[#allocation2 + $0x4] sm:$0xf]
      %v150 = vsel %vm142, %v148, -inf
      %151 = vmax.xlane.f32.xlu0 %v150
      %v152 = vpop.xlane.xlu0 %151
      %v153 = vsel %vm142, %v149, -inf
      %154 = vmax.xlane.f32.xlu0 %v153
      %v155 = vpop.xlane.xlu0 %154
      %v158 = vlaneseq
      %v159 = vand.u32 %v158, 127
      %v160 = vlaneseq
      %v161 = vshrl.u32 %v160, 7
      %v162 = vsub.s32 %v159, %v161
      %v163 = vrot.slane %v152, %v162
      %v164 = vlaneseq
      %v165 = vshrl.u32 %v164, 7
      %v166 = vsub.s32 %v159, %v165
      %v167 = vrot.slane %v155, %v166
      %vm170 = vcmask 24576
      %171 = vst.msk [vmem:[#allocation6] sm:$0x1] %vm170, %v163
      %172 = vst.msk [vmem:[#allocation6 + $0x1] sm:$0x1] %vm170, %v167
    $region17: #{tpu_custom_call.1} parent=1 // pred_fallthru
      _
    // Predicated region
    $region18: #{tpu_custom_call.1} parent=1 // pred_check
      _
    $region19: #{tpu_custom_call.1} parent=1 // pred_check_branch
      %174 = sbr.rel (0) target = $region21
    $region20: #{tpu_custom_call.1} parent=1 // pred_region
      %s176 = ssub.s32 32, 32
      %177 = vsyncadd [#allocation5], %s176
      %s178 = sshll.u32 [#allocation6], 4
      %s179 = int_to_ptr.vmem [resolvable:$true] %s178
      %184 = dma.vmem_to_hbm [thread:$0]  %s179, 32, %s1, [#allocation5], 16, 16, 1
    $region21: #{tpu_custom_call.1} parent=1 // pred_fallthru
      _
    // Predicated region
    $region22: #{tpu_custom_call.1} parent=1 // pred_check
      _
    $region23: #{tpu_custom_call.1} parent=1 // pred_check_branch
      %186 = sbr.rel (0) target = $region25
    $region24: #{tpu_custom_call.1} parent=1 // pred_region
      %187 = dma.done [#allocation5], 32
    $region25: #{tpu_custom_call.1} parent=1 // pred_fallthru
      _
    %188 = vsyncpa [#allocation4], 1
    %189 = vsyncpa [#allocation5], 1

</llo_original>
